<compile_context>
chip_gen: v7x
topology: tpu7x:2x2x1
jax: 0.10.0
libtpu: 0.0.40
codegen_flags: <defaults>
</compile_context>

<pallas_src>
from functools import partial

import numpy as np
import jax
import jax.numpy as jnp
from jax.experimental import pallas as pl
from jax.experimental.pallas import tpu as pltpu


def _trajectory_kernel(c_ref, delta_ref, sel_ref, left_ref, right_ref):
    # c_ref     : (TILE_B, Dp)   f32 VMEM   interval centers (batch tile)
    # delta_ref : (TILE_B, Dp)   f32 VMEM   interval half-widths (batch tile)
    # sel_ref   : (Dp, Kpad)     f32 VMEM   one-hot selection matrix (constant)
    # left_ref  : (TILE_B, Kpad) f32 VMEM   lower bounds of selected columns
    # right_ref : (TILE_B, Kpad) f32 VMEM   upper bounds of selected columns
    sel = sel_ref[...]
    # Gather along the lane (D) axis as an MXU matmul; do the matmuls FIRST so
    # the add/sub runs on the narrow (TILE_B, Kpad) result, not on (TILE_B, D).
    sel_c = jnp.dot(c_ref[...], sel, preferred_element_type=jnp.float32)
    sel_d = jnp.dot(delta_ref[...], sel, preferred_element_type=jnp.float32)
    left_ref[...] = (sel_c - sel_d).astype(left_ref.dtype)
    right_ref[...] = (sel_c + sel_d).astype(right_ref.dtype)


def _round_up(x, m):
    return ((x + m - 1) // m) * m


def _pick_tile_b(b, d, dtype_bytes=4):
    # Keep 2 inputs x 2 pipeline buffers x TILE_B*D*dtype under ~16 MiB so the
    # kernel double-buffers comfortably even on v7x's 64 MiB VMEM.
    budget = 16 * 1024 * 1024
    max_rows = max(8, budget // (4 * max(d, 1) * dtype_bytes))
    tile = min(512, max_rows)
    tile = max(8, (tile // 8) * 8)          # sublane-aligned
    return min(tile, _round_up(b, 8))       # never bigger than the padded batch


@jax.jit
def _trajectory_interval_jit(c, delta, idx):
    b, d = c.shape
    k = idx.shape[0]

    # Lane-dense output width (multiple of 128) to get unmasked vector stores.
    kpad = max(128, _round_up(k, 128))
    # Contraction axis padded to a sublane multiple (only copies when needed).
    d_pad = _round_up(d, 8)
    # Batch tile + padded batch.
    tile_b = _pick_tile_b(b, d_pad)
    b_pad = _round_up(max(b, tile_b), tile_b)

    if (b_pad, d_pad) != (b, d):
        pad = ((0, b_pad - b), (0, d_pad - d))
        c_p = jnp.pad(c, pad)
        delta_p = jnp.pad(delta, pad)
    else:
        c_p, delta_p = c, delta

    # One-hot selection matrix, built once on the host side of the kernel:
    # sel[p, j] = (p == idx[j]); padded columns use -1 so they stay all-zero.
    idx_pad = jnp.full((kpad,), -1, jnp.int32).at[:k].set(idx)
    p_iota = jax.lax.broadcasted_iota(jnp.int32, (d_pad, kpad), 0)
    sel = (p_iota == idx_pad[None, :]).astype(c.dtype)

    grid = (b_pad // tile_b,)
    left, right = pl.pallas_call(
        _trajectory_kernel,
        out_shape=(
            jax.ShapeDtypeStruct((b_pad, kpad), c.dtype),
            jax.ShapeDtypeStruct((b_pad, kpad), c.dtype),
        ),
        grid=grid,
        in_specs=[
            pl.BlockSpec((tile_b, d_pad), lambda i: (i, 0)),
            pl.BlockSpec((tile_b, d_pad), lambda i: (i, 0)),
            # Constant block index -> DMA'd once, reused across all batch tiles.
            pl.BlockSpec((d_pad, kpad), lambda i: (0, 0)),
        ],
        out_specs=(
            pl.BlockSpec((tile_b, kpad), lambda i: (i, 0)),
            pl.BlockSpec((tile_b, kpad), lambda i: (i, 0)),
        ),
        compiler_params=pltpu.CompilerParams(
            dimension_semantics=("parallel",)),
    )(c_p, delta_p, sel)

    return left[:b, :k], right[:b, :k]


def trajectory_interval_pallas(c, delta, target_idx):
    """(left, right) = (c - delta, c + delta) gathered at target_idx along
    dim 1.  Equivalent to x.select_from_index(1, idx).getInterval()."""
    idx_np = np.asarray(target_idx, dtype=np.int32).reshape(-1)
    d = c.shape[1]
    # Out-of-range indices would silently produce zero columns (unlike torch
    # index_select which raises), so validate on the host.
    if idx_np.size and (idx_np.min() < 0 or idx_np.max() >= d):
        raise IndexError(f"target_idx out of range for dim {d}: {idx_np}")
    return _trajectory_interval_jit(c, delta, jnp.asarray(idx_np))


def trajectory_forward(states, target_idx):
    """Forward pass of Trajectory: select + interval math in the Pallas
    kernel; per-batch trajectory bookkeeping stays on the host."""
    x = states['x']
    left, right = trajectory_interval_pallas(x['c'], x['delta'], target_idx)

    # TODO(synk): per-batch Python list appends (trajectories_l/_r) are
    # host-side mutable state with no Pallas equivalent; kept as glue.  We do
    # ONE host transfer per call instead of per-row syncs.
    left_np, right_np = jax.device_get((left, right))
    for b_idx in range(left_np.shape[0]):
        states['trajectories_l'][b_idx].append(left_np[b_idx])
        states['trajectories_r'][b_idx].append(right_np[b_idx])
    return states


if __name__ == "__main__":
    key = jax.random.PRNGKey(0)
    kc, kd = jax.random.split(key)

    # Small shapes consistent with the module's forward: x.c is (B, D).
    batch, dim = 2, 4
    target_idx = [1, 3]          # K = 2 selected columns

    c = jax.random.normal(kc, (batch, dim), dtype=jnp.float32)
    delta = jnp.abs(jax.random.normal(kd, (batch, dim), dtype=jnp.float32))

    # Run the kernel once and block on the result.
    left, right = trajectory_interval_pallas(c, delta, target_idx)
    left, right = jax.block_until_ready((left, right))

    # Pure-JAX reference check.
    idx = jnp.asarray(target_idx, jnp.int32)
    ref_left = (c - delta)[:, idx]
    ref_right = (c + delta)[:, idx]
    assert left.shape == (batch, len(target_idx)), left.shape
    assert right.shape == (batch, len(target_idx)), right.shape
    assert jnp.allclose(left, ref_left, atol=1e-6, rtol=1e-6), "left mismatch"
    assert jnp.allclose(right, ref_right, atol=1e-6, rtol=1e-6), "right mismatch"

    # Full module forward (host-side trajectory bookkeeping).
    states = {
        'x': {'c': c, 'delta': delta},
        'trajectories_l': [[] for _ in range(batch)],
        'trajectories_r': [[] for _ in range(batch)],
    }
    states = trajectory_forward(states, target_idx)
    assert len(states['trajectories_l'][0]) == 1
    assert len(states['trajectories_r'][0]) == 1
    assert np.allclose(states['trajectories_l'][0],
                       np.asarray(ref_left)[0], atol=1e-6)
    assert np.allclose(states['trajectories_r'][1],
                       np.asarray(ref_right)[1], atol=1e-6)

    print("KERNEL_OK")
</pallas_src>

<mosaic_0001>
module attributes {stable_mosaic.version = 11 : i64} {
  func.func @_trajectory_kernel(%arg0: i32, %arg1: memref<8x8xf32, #tpu.memory_space<vmem>>, %arg2: memref<8x8xf32, #tpu.memory_space<vmem>>, %arg3: memref<8x128xf32, #tpu.memory_space<vmem>>, %arg4: memref<8x128xf32, #tpu.memory_space<vmem>>, %arg5: memref<8x128xf32, #tpu.memory_space<vmem>>) attributes {dimension_semantics = [#tpu.dimension_semantics<parallel>], iteration_bounds = array<i64: 1>, scalar_prefetch = 0 : i64, scratch_operands = 0 : i64, tpu.core_type = #tpu.core_type<tc>, window_params = [{transform_indices = @transform_0, window_bounds = array<i64: 8, 8>}, {transform_indices = @transform_1, window_bounds = array<i64: 8, 8>}, {pipeline_mode = #tpu.pipeline_mode<synchronous>, transform_indices = @transform_2, window_bounds = array<i64: 8, 128>}, {transform_indices = @transform_3, window_bounds = array<i64: 8, 128>}, {transform_indices = @transform_4, window_bounds = array<i64: 8, 128>}]} {
    %c0 = arith.constant 0 : index
    %c0_0 = arith.constant 0 : index
    %0 = vector.load %arg3[%c0, %c0_0] : memref<8x128xf32, #tpu.memory_space<vmem>>, vector<8x128xf32>
    %c0_1 = arith.constant 0 : index
    %c0_2 = arith.constant 0 : index
    %1 = vector.load %arg1[%c0_1, %c0_2] : memref<8x8xf32, #tpu.memory_space<vmem>>, vector<8x8xf32>
    %cst = arith.constant dense<0.000000e+00> : vector<8x128xf32>
    %2 = tpu.matmul %1, %0, %cst {dimension_numbers = #tpu.dot_dimension_numbers<[1], [0], [0], [1], [0, 0, 1, 1], [], []>} : vector<8x8xf32>, vector<8x128xf32>, vector<8x128xf32> -> vector<8x128xf32>
    %c0_3 = arith.constant 0 : index
    %c0_4 = arith.constant 0 : index
    %3 = vector.load %arg2[%c0_3, %c0_4] : memref<8x8xf32, #tpu.memory_space<vmem>>, vector<8x8xf32>
    %cst_5 = arith.constant dense<0.000000e+00> : vector<8x128xf32>
    %4 = tpu.matmul %3, %0, %cst_5 {dimension_numbers = #tpu.dot_dimension_numbers<[1], [0], [0], [1], [0, 0, 1, 1], [], []>} : vector<8x8xf32>, vector<8x128xf32>, vector<8x128xf32> -> vector<8x128xf32>
    %5 = arith.subf %2, %4 : vector<8x128xf32>
    %c0_6 = arith.constant 0 : index
    %c0_7 = arith.constant 0 : index
    %6 = vector.load %arg4[%c0_6, %c0_7] : memref<8x128xf32, #tpu.memory_space<vmem>>, vector<8x128xf32>
    tpu.vector_store %arg4[%c0_6, %c0_7], %5 {strides = array<i32>} : memref<8x128xf32, #tpu.memory_space<vmem>>, vector<8x128xf32>,
    %7 = arith.addf %2, %4 : vector<8x128xf32>
    %c0_8 = arith.constant 0 : index
    %c0_9 = arith.constant 0 : index
    %8 = vector.load %arg5[%c0_8, %c0_9] : memref<8x128xf32, #tpu.memory_space<vmem>>, vector<8x128xf32>
    tpu.vector_store %arg5[%c0_8, %c0_9], %7 {strides = array<i32>} : memref<8x128xf32, #tpu.memory_space<vmem>>, vector<8x128xf32>,
    return
  }
  func.func @transform_0(%arg0: i32) -> (i32, i32) {
    %c0_i32 = arith.constant 0 : i32
    %c0_i32_0 = arith.constant 0 : i32
    return %arg0, %c0_i32 : i32, i32
  }
  func.func @transform_1(%arg0: i32) -> (i32, i32) {
    %c0_i32 = arith.constant 0 : i32
    %c0_i32_0 = arith.constant 0 : i32
    return %arg0, %c0_i32 : i32, i32
  }
  func.func @transform_2(%arg0: i32) -> (i32, i32) {
    %c0_i32 = arith.constant 0 : i32
    %c0_i32_0 = arith.constant 0 : i32
    %c0_i32_1 = arith.constant 0 : i32
    return %c0_i32, %c0_i32_0 : i32, i32
  }
  func.func @transform_3(%arg0: i32) -> (i32, i32) {
    %c0_i32 = arith.constant 0 : i32
    %c0_i32_0 = arith.constant 0 : i32
    return %arg0, %c0_i32 : i32, i32
  }
  func.func @transform_4(%arg0: i32) -> (i32, i32) {
    %c0_i32 = arith.constant 0 : i32
    %c0_i32_0 = arith.constant 0 : i32
    return %arg0, %c0_i32 : i32, i32
  }
}

</mosaic_0001>

<llo_original>
// kernel: _trajectory_interval_jit.1
$region0: #{_trajectory_interval_jit.1}
  #allocation0 [shape = 'u32[]', space=smem, size = 0x4, offset = 0x4, fixed_abs, tag = 'smem constant byte address 0x4 - core index']
  #allocation1 [shape = 'u32[144,128]{1,0:T(1,128)}', space=vmem, size = 0x12000, scoped, tag = 'internal scratch']
  %s0 = inlined_call_operand.vmem [shape: f32[8,8], index: 0, kind: input, shape index: {}]
  %s1 = inlined_call_operand.vmem [shape: f32[8,8], index: 1, kind: input, shape index: {}]
  %s2 = inlined_call_operand.vmem [shape: f32[8,128], index: 2, kind: input, shape index: {}]
  %s3 = inlined_call_operand.vmem [shape: f32[8,128], index: 3, kind: output, shape index: {0}]
  %s4 = inlined_call_operand.vmem [shape: f32[8,128], index: 4, kind: output, shape index: {1}]
  %5 = xla_tuple %s3, %s4
  %s6 = sld [smem:[#allocation0]]
  $region30: #{_trajectory_interval_jit.1} parent=0
    _
  %s8 = ssub.s32 1, %s6
  %s9 = scalar_select 0, %s8, %s6
  // Predicated region
  $region2: #{_trajectory_interval_jit.1} parent=0 // pred_check
    _
  $region3: #{_trajectory_interval_jit.1} parent=0 // pred_check_branch
    %11 = sbr.rel (0) target = $region5
  $region4: #{_trajectory_interval_jit.1} parent=0 // pred_region
    _
  $region5: #{_trajectory_interval_jit.1} parent=0 // pred_fallthru
    _
  // Predicated region
  $region6: #{_trajectory_interval_jit.1} parent=0 // pred_check
    _
  $region7: #{_trajectory_interval_jit.1} parent=0 // pred_check_branch
    %13 = sbr.rel (0) target = $region9
  $region8: #{_trajectory_interval_jit.1} parent=0 // pred_region
    _
  $region9: #{_trajectory_interval_jit.1} parent=0 // pred_fallthru
    _
  // Predicated region
  $region10: #{_trajectory_interval_jit.1} parent=0 // pred_check
    _
  $region11: #{_trajectory_interval_jit.1} parent=0 // pred_check_branch
    %15 = sbr.rel (0) target = $region13
  $region12: #{_trajectory_interval_jit.1} parent=0 // pred_region
    _
  $region13: #{_trajectory_interval_jit.1} parent=0 // pred_fallthru
    _
  %v16 = vld [vmem:[%s2] sm:$0xff]
  %v17 = vld [vmem:[%s0] sm:$0xff]
  %vm18 = vcmask 64512
  %v20 = vsel %vm18, %v17, 0
  %22 = vmatprep.subr.mxu0 0.0
  %23 = vmatpush1.msra.mxu0 %v16
  %24 = vmatprep.subr.mxu0 0.0
  %25 = vmatpush1.msra.mxu0 0.0
  %26 = vmatprep.subr.mxu0 0.0
  %27 = vmatpush1.msra.mxu0 0.0
  %28 = vmatprep.subr.mxu0 0.0
  %29 = vmatpush1.msra.mxu0 0.0
  %30 = vmatprep.subr.mxu0 0.0
  %31 = vmatpush1.msra.mxu0 0.0
  %32 = vmatprep.subr.mxu0 0.0
  %33 = vmatpush1.msra.mxu0 0.0
  %34 = vmatprep.subr.mxu0 0.0
  %35 = vmatpush1.msra.mxu0 0.0
  %36 = vmatprep.subr.mxu0 0.0
  %37 = vmatpush1.msra.mxu0 0.0
  %38 = vmatprep.subr.mxu0 0.0
  %39 = vmatpush1.msra.mxu0 0.0
  %40 = vmatprep.subr.mxu0 0.0
  %41 = vmatpush1.msra.mxu0 0.0
  %42 = vmatprep.subr.mxu0 0.0
  %43 = vmatpush1.msra.mxu0 0.0
  %44 = vmatprep.subr.mxu0 0.0
  %45 = vmatpush1.msra.mxu0 0.0
  %46 = vmatprep.subr.mxu0 0.0
  %47 = vmatpush1.msra.mxu0 0.0
  %48 = vmatprep.subr.mxu0 0.0
  %49 = vmatpush1.msra.mxu0 0.0
  %50 = vmatprep.subr.mxu0 0.0
  %51 = vmatpush1.msra.mxu0 0.0
  %52 = vmatprep.subr.mxu0 0.0
  %53 = vmatpush1.msra.mxu0 0.0
  %54 = vmatprep.subr.mxu0 0.0
  %55 = vmatpush1.msra.mxu0 0.0
  %56 = vmatprep.subr.mxu0 0.0
  %57 = vmatpush1.msra.mxu0 0.0
  %58 = vmatprep.subr.mxu0 0.0
  %59 = vmatpush1.msra.mxu0 0.0
  %60 = vmatprep.subr.mxu0 0.0
  %61 = vmatpush1.msra.mxu0 0.0
  %62 = vmatprep.subr.mxu0 0.0
  %63 = vmatpush1.msra.mxu0 0.0
  %64 = vmatprep.subr.mxu0 0.0
  %65 = vmatpush1.msra.mxu0 0.0
  %66 = vmatprep.subr.mxu0 0.0
  %67 = vmatpush1.msra.mxu0 0.0
  %68 = vmatprep.subr.mxu0 0.0
  %69 = vmatpush1.msra.mxu0 0.0
  %70 = vmatprep.subr.mxu0 0.0
  %71 = vmatpush1.msra.mxu0 0.0
  %72 = vmatprep.subr.mxu0 0.0
  %73 = vmatpush1.msra.mxu0 0.0
  %74 = vmatprep.subr.mxu0 0.0
  %75 = vmatpush1.msra.mxu0 0.0
  %76 = vmatprep.subr.mxu0 0.0
  %77 = vmatpush1.msra.mxu0 0.0
  %78 = vmatprep.subr.mxu0 0.0
  %79 = vmatpush1.msra.mxu0 0.0
  %80 = vmatprep.subr.mxu0 0.0
  %81 = vmatpush1.msra.mxu0 0.0
  %82 = vmatprep.subr.mxu0 0.0
  %83 = vmatpush1.msra.mxu0 0.0
  %84 = vmatprep.subr.mxu0 0.0
  %85 = vmatpush1.msra.mxu0 0.0
  %86 = vmatprep.mubr.f32.mxu0 0.0
  %87 = vmatmul.mubr.f32.gmra.mrb[0].mxu0 %v20
  %v88 = vpop.f32.mrb[0].mxu0
  %v89 = vadd.f32 0.0, %v88
  %v90 = vpop.f32.mrb[0].mxu0
  %91 = vdwg.mxu0
  %v92 = vld [vmem:[%s1] sm:$0xff]
  %v94 = vsel %vm18, %v92, 0
  %96 = vmatprep.subr.mxu0 0.0
  %97 = vmatpush1.msra.mxu0 %v16
  %98 = vmatprep.subr.mxu0 0.0
  %99 = vmatpush1.msra.mxu0 0.0
  %100 = vmatprep.subr.mxu0 0.0
  %101 = vmatpush1.msra.mxu0 0.0
  %102 = vmatprep.subr.mxu0 0.0
  %103 = vmatpush1.msra.mxu0 0.0
  %104 = vmatprep.subr.mxu0 0.0
  %105 = vmatpush1.msra.mxu0 0.0
  %106 = vmatprep.subr.mxu0 0.0
  %107 = vmatpush1.msra.mxu0 0.0
  %108 = vmatprep.subr.mxu0 0.0
  %109 = vmatpush1.msra.mxu0 0.0
  %110 = vmatprep.subr.mxu0 0.0
  %111 = vmatpush1.msra.mxu0 0.0
  %112 = vmatprep.subr.mxu0 0.0
  %113 = vmatpush1.msra.mxu0 0.0
  %114 = vmatprep.subr.mxu0 0.0
  %115 = vmatpush1.msra.mxu0 0.0
  %116 = vmatprep.subr.mxu0 0.0
  %117 = vmatpush1.msra.mxu0 0.0
  %118 = vmatprep.subr.mxu0 0.0
  %119 = vmatpush1.msra.mxu0 0.0
  %120 = vmatprep.subr.mxu0 0.0
  %121 = vmatpush1.msra.mxu0 0.0
  %122 = vmatprep.subr.mxu0 0.0
  %123 = vmatpush1.msra.mxu0 0.0
  %124 = vmatprep.subr.mxu0 0.0
  %125 = vmatpush1.msra.mxu0 0.0
  %126 = vmatprep.subr.mxu0 0.0
  %127 = vmatpush1.msra.mxu0 0.0
  %128 = vmatprep.subr.mxu0 0.0
  %129 = vmatpush1.msra.mxu0 0.0
  %130 = vmatprep.subr.mxu0 0.0
  %131 = vmatpush1.msra.mxu0 0.0
  %132 = vmatprep.subr.mxu0 0.0
  %133 = vmatpush1.msra.mxu0 0.0
  %134 = vmatprep.subr.mxu0 0.0
  %135 = vmatpush1.msra.mxu0 0.0
  %136 = vmatprep.subr.mxu0 0.0
  %137 = vmatpush1.msra.mxu0 0.0
  %138 = vmatprep.subr.mxu0 0.0
  %139 = vmatpush1.msra.mxu0 0.0
  %140 = vmatprep.subr.mxu0 0.0
  %141 = vmatpush1.msra.mxu0 0.0
  %142 = vmatprep.subr.mxu0 0.0
  %143 = vmatpush1.msra.mxu0 0.0
  %144 = vmatprep.subr.mxu0 0.0
  %145 = vmatpush1.msra.mxu0 0.0
  %146 = vmatprep.subr.mxu0 0.0
  %147 = vmatpush1.msra.mxu0 0.0
  %148 = vmatprep.subr.mxu0 0.0
  %149 = vmatpush1.msra.mxu0 0.0
  %150 = vmatprep.subr.mxu0 0.0
  %151 = vmatpush1.msra.mxu0 0.0
  %152 = vmatprep.subr.mxu0 0.0
  %153 = vmatpush1.msra.mxu0 0.0
  %154 = vmatprep.subr.mxu0 0.0
  %155 = vmatpush1.msra.mxu0 0.0
  %156 = vmatprep.subr.mxu0 0.0
  %157 = vmatpush1.msra.mxu0 0.0
  %158 = vmatprep.subr.mxu0 0.0
  %159 = vmatpush1.msra.mxu0 0.0
  %160 = vmatprep.mubr.f32.mxu0 0.0
  %161 = vmatmul.mubr.f32.gmra.mrb[0].mxu0 %v94
  %v162 = vpop.f32.mrb[0].mxu0
  %v163 = vadd.f32 0.0, %v162
  %v164 = vpop.f32.mrb[0].mxu0
  %165 = vdwg.mxu0
  %v166 = vsub.f32 %v89, %v163
  %167 = vst [vmem:[%s3] sm:$0xff] %v166
  %v168 = vadd.f32 %v89, %v163
  %169 = vst [vmem:[%s4] sm:$0xff] %v168
  // Predicated region
  $region14: #{_trajectory_interval_jit.1} parent=0 // pred_check
    _
  $region15: #{_trajectory_interval_jit.1} parent=0 // pred_check_branch
    %171 = sbr.rel (0) target = $region17
  $region16: #{_trajectory_interval_jit.1} parent=0 // pred_region
    _
  $region17: #{_trajectory_interval_jit.1} parent=0 // pred_fallthru
    _
  // Predicated region
  $region18: #{_trajectory_interval_jit.1} parent=0 // pred_check
    _
  $region19: #{_trajectory_interval_jit.1} parent=0 // pred_check_branch
    %173 = sbr.rel (0) target = $region21
  $region20: #{_trajectory_interval_jit.1} parent=0 // pred_region
    _
  $region21: #{_trajectory_interval_jit.1} parent=0 // pred_fallthru
    _
  // Predicated region
  $region22: #{_trajectory_interval_jit.1} parent=0 // pred_check
    _
  $region23: #{_trajectory_interval_jit.1} parent=0 // pred_check_branch
    %175 = sbr.rel (0) target = $region25
  $region24: #{_trajectory_interval_jit.1} parent=0 // pred_region
    _
  $region25: #{_trajectory_interval_jit.1} parent=0 // pred_fallthru
    _
  // Predicated region
  $region26: #{_trajectory_interval_jit.1} parent=0 // pred_check
    _
  $region27: #{_trajectory_interval_jit.1} parent=0 // pred_check_branch
    %177 = sbr.rel (0) target = $region29
  $region28: #{_trajectory_interval_jit.1} parent=0 // pred_region
    _
  $region29: #{_trajectory_interval_jit.1} parent=0 // pred_fallthru
    _

</llo_original>
